<compile_context>
chip_gen: v7x
topology: tpu7x:2x2x1
jax: 0.10.0
libtpu: 0.0.40
codegen_flags: <defaults>
</compile_context>

<pallas_src>
import jax
import jax.numpy as jnp
from jax.experimental import pallas as pl
from jax.experimental.pallas import tpu as pltpu

_LANE = 128
_SUBLANE = 8


def _round_up(x, m):
    return ((x + m - 1) // m) * m


def _round_down(x, m):
    return (x // m) * m


def _detect_vmem_capacity_bytes():
    """Per-TensorCore VMEM capacity; conservative 64 MiB if undetectable."""
    try:
        info = pltpu.get_tpu_info()
        for name in ("vmem_capacity_bytes", "vmem_size_bytes", "vmem_bytes"):
            v = getattr(info, name, None)
            if v:
                return int(v)
    except Exception:
        pass
    return 64 * 1024 * 1024


def _mid_kernel(x_ref, w7_ref, b7_ref, w8_ref, b8_ref, o_ref):
    x = x_ref[0]                                            # (C_in, tile_p)
    # conv7 (1x1) + bias + ReLU   -> (C_mid, tile_p), f32 accumulation.
    h = jnp.dot(w7_ref[...], x, preferred_element_type=jnp.float32)
    h = jnp.maximum(h + b7_ref[...], 0.0)
    # conv8 (1x1) + bias + ReLU   -> (C_out, tile_p).
    o = jnp.dot(w8_ref[...], h.astype(w8_ref.dtype),
                preferred_element_type=jnp.float32)
    o = jnp.maximum(o + b8_ref[...], 0.0)
    o_ref[0] = o.astype(o_ref.dtype)


def mid_level_features(x_nchw, w7, b7, w8, b8, *, tile_p=None,
                       compute_dtype=None, out_dtype=None):
    """Fused relu(conv8(relu(conv7(x)))) for 1x1 convs.

    x_nchw : (N, C_in, H, W)
    w7     : (C_mid, C_in, 1, 1)   PyTorch conv weight layout
    b7     : (C_mid,)
    w8     : (C_out, C_mid, 1, 1)
    b8     : (C_out,)
    tile_p : optional pixel (lane) tile override; default derives the largest
             multiple-of-128 tile that fits the per-chip VMEM budget.
    compute_dtype : optional (e.g. jnp.bfloat16).  Casts the WEIGHTS only; x is
             never cast in the wrapper (that would be an extra HBM pass) --
             provide bf16 activations from the producer for the full saving.
             Note: the ReLU intermediate is rounded to compute_dtype before the
             second matmul (~1e-2 rel error vs an f32 reference).
    out_dtype : optional output dtype (e.g. bf16 to halve store traffic).
    returns: (N, C_out, H, W)
    """
    N, C_in, H, W = x_nchw.shape
    C_mid = w7.shape[0]
    C_out = w8.shape[0]
    HW = H * W
    if out_dtype is None:
        out_dtype = x_nchw.dtype

    # Pixels on the lane axis: (N, C_in, H*W) -- pure reshape, no transpose.
    x_rows = x_nchw.reshape(N, C_in, HW)

    # Conv weights (C_out, C_in, 1, 1) are already in (out, in) matmul layout
    # for the pixel-on-lane orientation; biases broadcast over the lane axis.
    w7m = w7.reshape(C_mid, C_in)
    w8m = w8.reshape(C_out, C_mid)
    b7m = b7.reshape(C_mid, 1).astype(jnp.float32)
    b8m = b8.reshape(C_out, 1).astype(jnp.float32)
    if compute_dtype is not None:
        w7m = w7m.astype(compute_dtype)
        w8m = w8m.astype(compute_dtype)

    bpe_x = jnp.dtype(x_rows.dtype).itemsize
    bpe_w = jnp.dtype(w7m.dtype).itemsize
    bpe_o = jnp.dtype(out_dtype).itemsize

    # ---- VMEM budget & pixel-tile derivation --------------------------------
    vmem_cap = _detect_vmem_capacity_bytes()
    budget = max(16 << 20, min(int(0.75 * vmem_cap), 100 << 20))

    # Tile-independent residents (weights + biases), counted double-buffered so
    # the non-pipeline_mode fallback below still fits.
    fixed = 2 * ((_round_up(C_mid, _SUBLANE) * _round_up(C_in, _LANE)
                  + _round_up(C_out, _SUBLANE) * _round_up(C_mid, _LANE)) * bpe_w
                 + (_round_up(C_mid, _SUBLANE) + _round_up(C_out, _SUBLANE))
                 * _LANE * 4)

    x_buffers = 3 if C_in <= 128 else 2   # small K => DMA-latency bound
    per_lane = (x_buffers * _round_up(C_in, _SUBLANE) * bpe_x     # x tiles
                + 2 * _round_up(C_out, _SUBLANE) * bpe_o          # out tiles
                + _round_up(C_mid, _SUBLANE) * 4                  # f32 h
                + _round_up(C_out, _SUBLANE) * 4)                 # f32 o
    slack = 2 << 20                        # Mosaic internal scratch / spills

    avail = max(budget - fixed - slack, per_lane * _LANE)
    tile_auto = max(_LANE, min(_round_down(avail // per_lane, _LANE), 8192))

    if tile_p is None:
        tile_p = tile_auto
    else:
        tile_p = max(_LANE, min(_round_up(tile_p, _LANE), tile_auto))

    # A single block covering the whole pixel axis is always legal (block dim
    # == full array dim) and avoids reading past HW.
    if tile_p >= HW:
        tile_p = HW
    # Keep >= 2 grid points when possible so both v7x TensorCores get work.
    if N * pl.cdiv(HW, tile_p) < 2 and HW > _LANE:
        tile_p = _round_up(-(-HW // 2), _LANE)

    n_ptiles = pl.cdiv(HW, tile_p)
    grid = (N, n_ptiles)
    use_x_multibuf = (C_in <= 128 and n_ptiles >= 3)

    def _call(use_pipeline_mode):
        def spec(shape, index_map, nbuf=None):
            if use_pipeline_mode and nbuf is not None:
                return pl.BlockSpec(shape, index_map,
                                    pipeline_mode=pl.Buffered(nbuf))
            return pl.BlockSpec(shape, index_map)

        in_specs = [
            spec((1, C_in, tile_p), lambda b, p: (b, 0, p),
                 3 if use_x_multibuf else None),
            # Constant operands (index_map == (0,0)): single-buffered, they are
            # DMA'd once and never refetched.
            spec((C_mid, C_in), lambda b, p: (0, 0), 1),
            spec((C_mid, 1), lambda b, p: (0, 0), 1),
            spec((C_out, C_mid), lambda b, p: (0, 0), 1),
            spec((C_out, 1), lambda b, p: (0, 0), 1),
        ]
        return pl.pallas_call(
            _mid_kernel,
            out_shape=jax.ShapeDtypeStruct((N, C_out, HW), out_dtype),
            grid_spec=pltpu.PrefetchScalarGridSpec(
                num_scalar_prefetch=0,
                grid=grid,
                in_specs=in_specs,
                out_specs=pl.BlockSpec((1, C_out, tile_p),
                                       lambda b, p: (b, 0, p)),
            ),
            compiler_params=pltpu.CompilerParams(
                dimension_semantics=("parallel", "parallel"),
                vmem_limit_bytes=int(budget)),
        )(x_rows, w7m, b7m, w8m, b8m)

    try:
        out_rows = _call(True)
    except Exception:
        # pipeline_mode / pl.Buffered not accepted by this JAX build: fall back
        # to default double-buffering (only costs a dormant weight buffer).
        out_rows = _call(False)

    # Restore spatial dims (pure reshape, no transpose, no slicing).
    return out_rows.reshape(N, C_out, H, W)


def _init_conv_params(key, c_out, c_in):
    """Deterministic init mimicking PyTorch Conv2d default (kaiming-uniform-ish)."""
    kw, kb = jax.random.split(key)
    fan_in = c_in  # kernel_size = 1
    bound = 1.0 / jnp.sqrt(fan_in)
    w = jax.random.uniform(kw, (c_out, c_in, 1, 1), jnp.float32, -bound, bound)
    b = jax.random.uniform(kb, (c_out,), jnp.float32, -bound, bound)
    return w, b


def _reference(x, w7, b7, w8, b8):
    c_mid = w7.shape[0]
    c_out = w8.shape[0]
    h = jnp.maximum(
        jnp.einsum('oc,nchw->nohw', w7.reshape(c_mid, -1), x)
        + b7[None, :, None, None], 0.0)
    return jnp.maximum(
        jnp.einsum('oc,nchw->nohw', w8.reshape(c_out, -1), h)
        + b8[None, :, None, None], 0.0)


if __name__ == "__main__":
    # Small shapes consistent with the module: net_divisor=16 -> channels 32,32,16.
    net_divisor = 16
    C_in, C_mid, C_out = 512 // net_divisor, 512 // net_divisor, 256 // net_divisor
    N, H, W = 2, 16, 16

    key = jax.random.PRNGKey(0)
    kx, k7, k8 = jax.random.split(key, 3)

    x = jax.random.normal(kx, (N, C_in, H, W), jnp.float32)
    w7, b7 = _init_conv_params(k7, C_mid, C_in)
    w8, b8 = _init_conv_params(k8, C_out, C_mid)

    out = jax.block_until_ready(mid_level_features(x, w7, b7, w8, b8))
    ref = _reference(x, w7, b7, w8, b8)
    assert out.shape == (N, C_out, H, W)
    assert jnp.allclose(out, ref, atol=1e-5, rtol=1e-5)

    # Non-128-multiple pixel count: single full-axis block per batch (block dim
    # equals the full array dim), no host-side pad/slice.
    H2, W2 = 15, 13
    x2 = jax.random.normal(jax.random.PRNGKey(1), (N, C_in, H2, W2), jnp.float32)
    out2 = jax.block_until_ready(mid_level_features(x2, w7, b7, w8, b8))
    ref2 = _reference(x2, w7, b7, w8, b8)
    assert out2.shape == (N, C_out, H2, W2)
    assert jnp.allclose(out2, ref2, atol=1e-5, rtol=1e-5)

    # Forced small tile: ragged last pixel block, writeback masked by Pallas to
    # the true HW extent.
    out2b = jax.block_until_ready(
        mid_level_features(x2, w7, b7, w8, b8, tile_p=128))
    assert jnp.allclose(out2b, ref2, atol=1e-5, rtol=1e-5)

    # N=1 path: pixel axis is split into 2 tiles so both v7x TCs get work.
    x3 = jax.random.normal(jax.random.PRNGKey(2), (1, C_in, H, W), jnp.float32)
    out3 = jax.block_until_ready(mid_level_features(x3, w7, b7, w8, b8))
    ref3 = _reference(x3, w7, b7, w8, b8)
    assert out3.shape == (1, C_out, H, W)
    assert jnp.allclose(out3, ref3, atol=1e-5, rtol=1e-5)

    print("KERNEL_OK")
</pallas_src>

<mosaic_0001>
module attributes {stable_mosaic.version = 11 : i64} {
  func.func @_mid_kernel(%arg0: i32, %arg1: i32, %arg2: memref<1x32x256xf32, #tpu.memory_space<vmem>>, %arg3: memref<32x32xf32, #tpu.memory_space<vmem>>, %arg4: memref<32x1xf32, #tpu.memory_space<vmem>>, %arg5: memref<16x32xf32, #tpu.memory_space<vmem>>, %arg6: memref<16x1xf32, #tpu.memory_space<vmem>>, %arg7: memref<1x16x256xf32, #tpu.memory_space<vmem>>) attributes {dimension_semantics = [#tpu.dimension_semantics<parallel>, #tpu.dimension_semantics<parallel>], iteration_bounds = array<i64: 2, 1>, scalar_prefetch = 0 : i64, scratch_operands = 0 : i64, tpu.core_type = #tpu.core_type<tc>, window_params = [{transform_indices = @transform_0, window_bounds = array<i64: 1, 32, 256>}, {pipeline_mode = #tpu.pipeline_mode<synchronous>, transform_indices = @transform_1, window_bounds = array<i64: 32, 32>}, {pipeline_mode = #tpu.pipeline_mode<synchronous>, transform_indices = @transform_2, window_bounds = array<i64: 32, 1>}, {pipeline_mode = #tpu.pipeline_mode<synchronous>, transform_indices = @transform_3, window_bounds = array<i64: 16, 32>}, {pipeline_mode = #tpu.pipeline_mode<synchronous>, transform_indices = @transform_4, window_bounds = array<i64: 16, 1>}, {transform_indices = @transform_5, window_bounds = array<i64: 1, 16, 256>}]} {
    %c0 = arith.constant 0 : index
    %c0_0 = arith.constant 0 : index
    %c0_1 = arith.constant 0 : index
    %0 = vector.load %arg2[%c0, %c0_0, %c0_1] : memref<1x32x256xf32, #tpu.memory_space<vmem>>, vector<1x32x256xf32>
    %1 = vector.shape_cast %0 : vector<1x32x256xf32> to vector<32x256xf32>
    %c0_2 = arith.constant 0 : index
    %c0_3 = arith.constant 0 : index
    %2 = vector.load %arg3[%c0_2, %c0_3] : memref<32x32xf32, #tpu.memory_space<vmem>>, vector<32x32xf32>
    %cst = arith.constant dense<0.000000e+00> : vector<32x256xf32>
    %3 = tpu.matmul %2, %1, %cst {dimension_numbers = #tpu.dot_dimension_numbers<[1], [0], [0], [1], [0, 0, 1, 1], [], []>} : vector<32x32xf32>, vector<32x256xf32>, vector<32x256xf32> -> vector<32x256xf32>
    %c0_4 = arith.constant 0 : index
    %c0_5 = arith.constant 0 : index
    %4 = vector.load %arg4[%c0_4, %c0_5] : memref<32x1xf32, #tpu.memory_space<vmem>>, vector<32x1xf32>
    %5 = vector.broadcast %4 : vector<32x1xf32> to vector<32x256xf32>
    %6 = arith.addf %3, %5 : vector<32x256xf32>
    %cst_6 = arith.constant 0.000000e+00 : f32
    %7 = vector.broadcast %cst_6 : f32 to vector<32x256xf32>
    %8 = arith.maximumf %6, %7 : vector<32x256xf32>
    %c0_7 = arith.constant 0 : index
    %c0_8 = arith.constant 0 : index
    %9 = vector.load %arg5[%c0_7, %c0_8] : memref<16x32xf32, #tpu.memory_space<vmem>>, vector<16x32xf32>
    %cst_9 = arith.constant dense<0.000000e+00> : vector<16x256xf32>
    %10 = tpu.matmul %9, %8, %cst_9 {dimension_numbers = #tpu.dot_dimension_numbers<[1], [0], [0], [1], [0, 0, 1, 1], [], []>} : vector<16x32xf32>, vector<32x256xf32>, vector<16x256xf32> -> vector<16x256xf32>
    %c0_10 = arith.constant 0 : index
    %c0_11 = arith.constant 0 : index
    %11 = vector.load %arg6[%c0_10, %c0_11] : memref<16x1xf32, #tpu.memory_space<vmem>>, vector<16x1xf32>
    %12 = vector.broadcast %11 : vector<16x1xf32> to vector<16x256xf32>
    %13 = arith.addf %10, %12 : vector<16x256xf32>
    %cst_12 = arith.constant 0.000000e+00 : f32
    %14 = vector.broadcast %cst_12 : f32 to vector<16x256xf32>
    %15 = arith.maximumf %13, %14 : vector<16x256xf32>
    %c0_13 = arith.constant 0 : index
    %c0_14 = arith.constant 0 : index
    %c0_15 = arith.constant 0 : index
    %16 = vector.load %arg7[%c0_13, %c0_14, %c0_15] : memref<1x16x256xf32, #tpu.memory_space<vmem>>, vector<1x16x256xf32>
    %17 = vector.shape_cast %16 : vector<1x16x256xf32> to vector<16x256xf32>
    %18 = vector.shape_cast %15 : vector<16x256xf32> to vector<1x16x256xf32>
    tpu.vector_store %arg7[%c0_13, %c0_14, %c0_15], %18 {strides = array<i32>} : memref<1x16x256xf32, #tpu.memory_space<vmem>>, vector<1x16x256xf32>,
    return
  }
  func.func @transform_0(%arg0: i32, %arg1: i32) -> (i32, i32, i32) {
    %c0_i32 = arith.constant 0 : i32
    %c0_i32_0 = arith.constant 0 : i32
    return %arg0, %c0_i32, %arg1 : i32, i32, i32
  }
  func.func @transform_1(%arg0: i32, %arg1: i32) -> (i32, i32) {
    %c0_i32 = arith.constant 0 : i32
    %c0_i32_0 = arith.constant 0 : i32
    %c0_i32_1 = arith.constant 0 : i32
    return %c0_i32, %c0_i32_0 : i32, i32
  }
  func.func @transform_2(%arg0: i32, %arg1: i32) -> (i32, i32) {
    %c0_i32 = arith.constant 0 : i32
    %c0_i32_0 = arith.constant 0 : i32
    %c0_i32_1 = arith.constant 0 : i32
    return %c0_i32, %c0_i32_0 : i32, i32
  }
  func.func @transform_3(%arg0: i32, %arg1: i32) -> (i32, i32) {
    %c0_i32 = arith.constant 0 : i32
    %c0_i32_0 = arith.constant 0 : i32
    %c0_i32_1 = arith.constant 0 : i32
    return %c0_i32, %c0_i32_0 : i32, i32
  }
  func.func @transform_4(%arg0: i32, %arg1: i32) -> (i32, i32) {
    %c0_i32 = arith.constant 0 : i32
    %c0_i32_0 = arith.constant 0 : i32
    %c0_i32_1 = arith.constant 0 : i32
    return %c0_i32, %c0_i32_0 : i32, i32
  }
  func.func @transform_5(%arg0: i32, %arg1: i32) -> (i32, i32, i32) {
    %c0_i32 = arith.constant 0 : i32
    %c0_i32_0 = arith.constant 0 : i32
    return %arg0, %c0_i32, %arg1 : i32, i32, i32
  }
}

module attributes {stable_mosaic.version = 11 : i64} {
  func.func @_mid_kernel(%arg0: i32, %arg1: i32, %arg2: memref<1x32x256xf32, #tpu.memory_space<vmem>>, %arg3: memref<32x32xf32, #tpu.memory_space<vmem>>, %arg4: memref<32x1xf32, #tpu.memory_space<vmem>>, %arg5: memref<16x32xf32, #tpu.memory_space<vmem>>, %arg6: memref<16x1xf32, #tpu.memory_space<vmem>>, %arg7: memref<1x16x256xf32, #tpu.memory_space<vmem>>) attributes {dimension_semantics = [#tpu.dimension_semantics<parallel>, #tpu.dimension_semantics<parallel>], iteration_bounds = array<i64: 2, 1>, scalar_prefetch = 0 : i64, scratch_operands = 0 : i64, tpu.core_type = #tpu.core_type<tc>, window_params = [{transform_indices = @transform_0, window_bounds = array<i64: 1, 32, 256>}, {pipeline_mode = #tpu.pipeline_mode<synchronous>, transform_indices = @transform_1, window_bounds = array<i64: 32, 32>}, {pipeline_mode = #tpu.pipeline_mode<synchronous>, transform_indices = @transform_2, window_bounds = array<i64: 32, 1>}, {pipeline_mode = #tpu.pipeline_mode<synchronous>, transform_indices = @transform_3, window_bounds = array<i64: 16, 32>}, {pipeline_mode = #tpu.pipeline_mode<synchronous>, transform_indices = @transform_4, window_bounds = array<i64: 16, 1>}, {transform_indices = @transform_5, window_bounds = array<i64: 1, 16, 256>}]} {
    %c0 = arith.constant 0 : index
    %c0_0 = arith.constant 0 : index
    %c0_1 = arith.constant 0 : index
    %0 = vector.load %arg2[%c0, %c0_0, %c0_1] : memref<1x32x256xf32, #tpu.memory_space<vmem>>, vector<1x32x256xf32>
    %1 = vector.shape_cast %0 : vector<1x32x256xf32> to vector<32x256xf32>
    %c0_2 = arith.constant 0 : index
    %c0_3 = arith.constant 0 : index
    %2 = vector.load %arg3[%c0_2, %c0_3] : memref<32x32xf32, #tpu.memory_space<vmem>>, vector<32x32xf32>
    %cst = arith.constant dense<0.000000e+00> : vector<32x256xf32>
    %3 = tpu.matmul %2, %1, %cst {dimension_numbers = #tpu.dot_dimension_numbers<[1], [0], [0], [1], [0, 0, 1, 1], [], []>} : vector<32x32xf32>, vector<32x256xf32>, vector<32x256xf32> -> vector<32x256xf32>
    %c0_4 = arith.constant 0 : index
    %c0_5 = arith.constant 0 : index
    %4 = vector.load %arg4[%c0_4, %c0_5] : memref<32x1xf32, #tpu.memory_space<vmem>>, vector<32x1xf32>
    %5 = vector.broadcast %4 : vector<32x1xf32> to vector<32x256xf32>
    %6 = arith.addf %3, %5 : vector<32x256xf32>
    %cst_6 = arith.constant 0.000000e+00 : f32
    %7 = vector.broadcast %cst_6 : f32 to vector<32x256xf32>
    %8 = arith.maximumf %6, %7 : vector<32x256xf32>
    %c0_7 = arith.constant 0 : index
    %c0_8 = arith.constant 0 : index
    %9 = vector.load %arg5[%c0_7, %c0_8] : memref<16x32xf32, #tpu.memory_space<vmem>>, vector<16x32xf32>
    %cst_9 = arith.constant dense<0.000000e+00> : vector<16x256xf32>
    %10 = tpu.matmul %9, %8, %cst_9 {dimension_numbers = #tpu.dot_dimension_numbers<[1], [0], [0], [1], [0, 0, 1, 1], [], []>} : vector<16x32xf32>, vector<32x256xf32>, vector<16x256xf32> -> vector<16x256xf32>
    %c0_10 = arith.constant 0 : index
    %c0_11 = arith.constant 0 : index
    %11 = vector.load %arg6[%c0_10, %c0_11] : memref<16x1xf32, #tpu.memory_space<vmem>>, vector<16x1xf32>
    %12 = vector.broadcast %11 : vector<16x1xf32> to vector<16x256xf32>
    %13 = arith.addf %10, %12 : vector<16x256xf32>
    %cst_12 = arith.constant 0.000000e+00 : f32
    %14 = vector.broadcast %cst_12 : f32 to vector<16x256xf32>
    %15 = arith.maximumf %13, %14 : vector<16x256xf32>
    %c0_13 = arith.constant 0 : index
    %c0_14 = arith.constant 0 : index
    %c0_15 = arith.constant 0 : index
    %16 = vector.load %arg7[%c0_13, %c0_14, %c0_15] : memref<1x16x256xf32, #tpu.memory_space<vmem>>, vector<1x16x256xf32>
    %17 = vector.shape_cast %16 : vector<1x16x256xf32> to vector<16x256xf32>
    %18 = vector.shape_cast %15 : vector<16x256xf32> to vector<1x16x256xf32>
    tpu.vector_store %arg7[%c0_13, %c0_14, %c0_15], %18 {strides = array<i32>} : memref<1x16x256xf32, #tpu.memory_space<vmem>>, vector<1x16x256xf32>,
    return
  }
  func.func @transform_0(%arg0: i32, %arg1: i32) -> (i32, i32, i32) {
    %c0_i32 = arith.constant 0 : i32
    %c0_i32_0 = arith.constant 0 : i32
    return %arg0, %c0_i32, %arg1 : i32, i32, i32
  }
  func.func @transform_1(%arg0: i32, %arg1: i32) -> (i32, i32) {
    %c0_i32 = arith.constant 0 : i32
    %c0_i32_0 = arith.constant 0 : i32
    %c0_i32_1 = arith.constant 0 : i32
    return %c0_i32, %c0_i32_0 : i32, i32
  }
  func.func @transform_2(%arg0: i32, %arg1: i32) -> (i32, i32) {
    %c0_i32 = arith.constant 0 : i32
    %c0_i32_0 = arith.constant 0 : i32
    %c0_i32_1 = arith.constant 0 : i32
    return %c0_i32, %c0_i32_0 : i32, i32
  }
  func.func @transform_3(%arg0: i32, %arg1: i32) -> (i32, i32) {
    %c0_i32 = arith.constant 0 : i32
    %c0_i32_0 = arith.constant 0 : i32
    %c0_i32_1 = arith.constant 0 : i32
    return %c0_i32, %c0_i32_0 : i32, i32
  }
  func.func @transform_4(%arg0: i32, %arg1: i32) -> (i32, i32) {
    %c0_i32 = arith.constant 0 : i32
    %c0_i32_0 = arith.constant 0 : i32
    %c0_i32_1 = arith.constant 0 : i32
    return %c0_i32, %c0_i32_0 : i32, i32
  }
  func.func @transform_5(%arg0: i32, %arg1: i32) -> (i32, i32, i32) {
    %c0_i32 = arith.constant 0 : i32
    %c0_i32_0 = arith.constant 0 : i32
    return %arg0, %c0_i32, %arg1 : i32, i32, i32
  }
}

</mosaic_0001>

<llo_original>
// kernel: tpu_custom_call.1
$region0: #{tpu_custom_call.1}
  #allocation0 [shape = 'u32[]', space=smem, size = 0x4, offset = 0x4, fixed_abs, tag = 'smem constant byte address 0x4 - core index']
  #allocation1 [shape = 'u32[144,128]{1,0:T(1,128)}', space=vmem, size = 0x12000, scoped, tag = 'internal scratch']
  %s0 = inlined_call_operand.hbm [shape: f32[2,32,256], index: 0, kind: input, shape index: {}]
  %s1 = inlined_call_operand.vmem [shape: f32[32,32], index: 1, kind: input, shape index: {}]
  %s2 = inlined_call_operand.vmem [shape: f32[32,1], index: 2, kind: input, shape index: {}]
  %s3 = inlined_call_operand.vmem [shape: f32[16,32], index: 3, kind: input, shape index: {}]
  %s4 = inlined_call_operand.vmem [shape: f32[16,1], index: 4, kind: input, shape index: {}]
  %s5 = inlined_call_operand.hbm [shape: f32[2,16,256], index: 5, kind: output, shape index: {}]
  %s6 = sld [smem:[#allocation0]]
  $region57: #{tpu_custom_call.1} parent=0
    _
  %s8 = ssub.s32 1, %s6
  %s9 = scalar_select 0, %s8, %s6
  $region1: #{tpu_custom_call.1} parent=0
    #allocation2 [shape = 'u8[65536]{0}', space=vmem, size = 0x10000, scoped, tag = 'input window, operand 0']
    #allocation3 [shape = 's32[2]{0}', space=sflag, size = 0x8, scoped, tag = 'scoped memory for tpu_custom_call.1']
    #allocation4 [shape = 's32[2]{0}', space=sflag, size = 0x8, scoped, tag = 'scoped memory for tpu_custom_call.1']
    #allocation5 [shape = 'u8[32768]{0}', space=vmem, size = 0x8000, scoped, tag = 'output window, operand 0']
    %10 = vsyncpa [#allocation3], 0
    %s11 = scalar_lea.sflag [#allocation3], 1
    %12 = vsyncpa %s11, 0
    %13 = vsyncpa [#allocation4], 0
    %s14 = scalar_lea.sflag [#allocation4], 1
    %15 = vsyncpa %s14, 0
    loop: start=0, step=1, limit=4
    $region2: #{tpu_custom_call.1} parent=1 // loop_pre_header
      _
    $region3: #{tpu_custom_call.1} parent=1 // loop_header
      %s17 = sphi 0, %s21
      %p18 = scmp.ge.s32.totalorder %s17, 4
      %s24 = sphi 0, %s36
      %s25 = sphi 0, %s32
      %s26 = sphi 0, %s24
      %s27 = sphi 0, %s25
      %s28 = sphi 0, %s26
      %s29 = sphi 0, %s27
      %s41 = sphi 0, %s43
      %s44 = sphi 0, %s41
      %s45 = sphi 0, %s44
      %s61 = sphi 0, %s45
      %s65 = sphi 0, %s65
      %s67 = sphi 0, %s65
      %s68 = sphi 0, %s67
      %s82 = sphi 0, %s68
      %s86 = sphi 0, %s86
      %s88 = sphi 0, %s86
      %s89 = sphi 0, %s88
      %s103 = sphi 0, %s89
      %s107 = sphi 0, %s107
      %s109 = sphi 0, %s107
      %s110 = sphi 0, %s109
      %s124 = sphi 0, %s110
      %s128 = sphi 0, %s128
      %s130 = sphi 0, %s128
      %s131 = sphi 0, %s130
      %s145 = sphi 0, %s131
      %s153 = sphi 0, %s155
      %s156 = sphi 0, %s153
      %s157 = sphi 0, %s156
      %s173 = sphi 0, %s157
    $region4: #{tpu_custom_call.1} parent=1 // loop_header_branch
      %20 = sbr.rel (%p18) target = $region8
    $region5: #{tpu_custom_call.1} parent=1 // loop_body
      %s22 = ssub.s32 %s17, 1
      %s23 = ssub.s32 %s17, 2
      %s30 = sadd.s32 1, %s25
      %p31 = scmp.ge.s32.totalorder %s30, 1
      %s32 = scalar_select %p31, 0, %s30
      %s33 = sadd.s32 1, %s24
      %s34 = scalar_select %p31, %s33, %s24
      %p35 = scmp.ge.s32.totalorder %s34, 2
      %s36 = scalar_select %p35, 0, %s34
      %s37 = ssub.s32 %s24, %s36
      %s38 = ssub.s32 %s25, %s32
      %s39 = sor.u32 %s37, %s38
      %p40 = scmp.eq.s32.totalorder %s39, 0
      %s42 = sadd.s32 %s41, 1
      %s43 = scalar_select %p40, %s41, %s42
      %p46 = pneg %p40
      %p47 = scmp.eq.s32.totalorder %s17, 1
      %p48 = por %p46, %p47
      %p49 = scmp.ne.s32.totalorder %s41, %s44
      %p50 = scmp.eq.s32.totalorder %s17, 0
      %p51 = por %p49, %p50
      %p52 = scmp.ne.s32.totalorder %s41, %s44
      %p53 = scmp.eq.s32.totalorder %s22, 1
      %p54 = por %p52, %p53
      %p55 = scmp.ne.s32.totalorder %s44, %s45
      %p56 = scmp.eq.s32.totalorder %s22, 0
      %p57 = por %p55, %p56
      %p58 = scmp.ne.s32.totalorder %s44, %s45
      %p59 = scmp.eq.s32.totalorder %s23, 1
      %p60 = por %p58, %p59
      %p62 = scmp.ne.s32.totalorder %s45, %s61
      %p63 = scmp.eq.s32.totalorder %s23, 0
      %p64 = por %p62, %p63
      %s66 = sadd.s32 %s65, 1
      %p69 = scmp.eq.s32.totalorder %s17, 1
      %p70 = scmp.ne.s32.totalorder %s65, %s67
      %p71 = scmp.eq.s32.totalorder %s17, 0
      %p72 = por %p70, %p71
      %p73 = scmp.ne.s32.totalorder %s65, %s67
      %p74 = scmp.eq.s32.totalorder %s22, 1
      %p75 = por %p73, %p74
      %p76 = scmp.ne.s32.totalorder %s67, %s68
      %p77 = scmp.eq.s32.totalorder %s22, 0
      %p78 = por %p76, %p77
      %p79 = scmp.ne.s32.totalorder %s67, %s68
      %p80 = scmp.eq.s32.totalorder %s23, 1
      %p81 = por %p79, %p80
      %p83 = scmp.ne.s32.totalorder %s68, %s82
      %p84 = scmp.eq.s32.totalorder %s23, 0
      %p85 = por %p83, %p84
      %s87 = sadd.s32 %s86, 1
      %p90 = scmp.eq.s32.totalorder %s17, 1
      %p91 = scmp.ne.s32.totalorder %s86, %s88
      %p92 = scmp.eq.s32.totalorder %s17, 0
      %p93 = por %p91, %p92
      %p94 = scmp.ne.s32.totalorder %s86, %s88
      %p95 = scmp.eq.s32.totalorder %s22, 1
      %p96 = por %p94, %p95
      %p97 = scmp.ne.s32.totalorder %s88, %s89
      %p98 = scmp.eq.s32.totalorder %s22, 0
      %p99 = por %p97, %p98
      %p100 = scmp.ne.s32.totalorder %s88, %s89
      %p101 = scmp.eq.s32.totalorder %s23, 1
      %p102 = por %p100, %p101
      %p104 = scmp.ne.s32.totalorder %s89, %s103
      %p105 = scmp.eq.s32.totalorder %s23, 0
      %p106 = por %p104, %p105
      %s108 = sadd.s32 %s107, 1
      %p111 = scmp.eq.s32.totalorder %s17, 1
      %p112 = scmp.ne.s32.totalorder %s107, %s109
      %p113 = scmp.eq.s32.totalorder %s17, 0
      %p114 = por %p112, %p113
      %p115 = scmp.ne.s32.totalorder %s107, %s109
      %p116 = scmp.eq.s32.totalorder %s22, 1
      %p117 = por %p115, %p116
      %p118 = scmp.ne.s32.totalorder %s109, %s110
      %p119 = scmp.eq.s32.totalorder %s22, 0
      %p120 = por %p118, %p119
      %p121 = scmp.ne.s32.totalorder %s109, %s110
      %p122 = scmp.eq.s32.totalorder %s23, 1
      %p123 = por %p121, %p122
      %p125 = scmp.ne.s32.totalorder %s110, %s124
      %p126 = scmp.eq.s32.totalorder %s23, 0
      %p127 = por %p125, %p126
      %s129 = sadd.s32 %s128, 1
      %p132 = scmp.eq.s32.totalorder %s17, 1
      %p133 = scmp.ne.s32.totalorder %s128, %s130
      %p134 = scmp.eq.s32.totalorder %s17, 0
      %p135 = por %p133, %p134
      %p136 = scmp.ne.s32.totalorder %s128, %s130
      %p137 = scmp.eq.s32.totalorder %s22, 1
      %p138 = por %p136, %p137
      %p139 = scmp.ne.s32.totalorder %s130, %s131
      %p140 = scmp.eq.s32.totalorder %s22, 0
      %p141 = por %p139, %p140
      %p142 = scmp.ne.s32.totalorder %s130, %s131
      %p143 = scmp.eq.s32.totalorder %s23, 1
      %p144 = por %p142, %p143
      %p146 = scmp.ne.s32.totalorder %s131, %s145
      %p147 = scmp.eq.s32.totalorder %s23, 0
      %p148 = por %p146, %p147
      %s149 = ssub.s32 %s24, %s36
      %s150 = ssub.s32 %s25, %s32
      %s151 = sor.u32 %s149, %s150
      %p152 = scmp.eq.s32.totalorder %s151, 0
      %s154 = sadd.s32 %s153, 1
      %s155 = scalar_select %p152, %s153, %s154
      %p158 = pneg %p152
      %p159 = scmp.eq.s32.totalorder %s17, 1
      %p160 = por %p158, %p159
      %p161 = scmp.ne.s32.totalorder %s153, %s156
      %p162 = scmp.eq.s32.totalorder %s17, 0
      %p163 = por %p161, %p162
      %p164 = scmp.ne.s32.totalorder %s153, %s156
      %p165 = scmp.eq.s32.totalorder %s22, 1
      %p166 = por %p164, %p165
      %p167 = scmp.ne.s32.totalorder %s156, %s157
      %p168 = scmp.eq.s32.totalorder %s22, 0
      %p169 = por %p167, %p168
      %p170 = scmp.ne.s32.totalorder %s156, %s157
      %p171 = scmp.eq.s32.totalorder %s23, 1
      %p172 = por %p170, %p171
      %p174 = scmp.ne.s32.totalorder %s157, %s173
      %p175 = scmp.eq.s32.totalorder %s23, 0
      %p176 = por %p174, %p175
      %p177 = scmp.le.s32.totalorder 1, %s17
      %p178 = scmp.lt.s32.totalorder %s17, 3
      %p179 = pnand %p177, %p178
      %p180 = pneg %p179
      // Predicated region
      $region9: #{tpu_custom_call.1} parent=5 // pred_check
        _
      $region10: #{tpu_custom_call.1} parent=5 // pred_check_branch
        %182 = sbr.rel (%p179) target = $region12
      $region11: #{tpu_custom_call.1} parent=5 // pred_region
        %s183 = ssub.s32 %s17, 1
        // Predicated region
        $region13: #{tpu_custom_call.1} parent=11 // pred_check
          %p184 = pneg %p78
        $region14: #{tpu_custom_call.1} parent=11 // pred_check_branch
          %186 = sbr.rel (%p184) target = $region16
        $region15: #{tpu_custom_call.1} parent=11 // pred_region
          _
        $region16: #{tpu_custom_call.1} parent=11 // pred_fallthru
          _
        // Predicated region
        $region17: #{tpu_custom_call.1} parent=11 // pred_check
          %p187 = pneg %p99
        $region18: #{tpu_custom_call.1} parent=11 // pred_check_branch
          %189 = sbr.rel (%p187) target = $region20
        $region19: #{tpu_custom_call.1} parent=11 // pred_region
          _
        $region20: #{tpu_custom_call.1} parent=11 // pred_fallthru
          _
        // Predicated region
        $region21: #{tpu_custom_call.1} parent=11 // pred_check
          %p190 = pneg %p120
        $region22: #{tpu_custom_call.1} parent=11 // pred_check_branch
          %192 = sbr.rel (%p190) target = $region24
        $region23: #{tpu_custom_call.1} parent=11 // pred_region
          _
        $region24: #{tpu_custom_call.1} parent=11 // pred_fallthru
          _
        // Predicated region
        $region25: #{tpu_custom_call.1} parent=11 // pred_check
          %p193 = pneg %p141
        $region26: #{tpu_custom_call.1} parent=11 // pred_check_branch
          %195 = sbr.rel (%p193) target = $region28
        $region27: #{tpu_custom_call.1} parent=11 // pred_region
          _
        $region28: #{tpu_custom_call.1} parent=11 // pred_fallthru
          _
      $region12: #{tpu_custom_call.1} parent=5 // pred_fallthru
        _
      %p196 = scmp.lt.s32.totalorder %s17, 2
      // Predicated region
      $region29: #{tpu_custom_call.1} parent=5 // pred_check
        %p197 = pneg %p196
      $region30: #{tpu_custom_call.1} parent=5 // pred_check_branch
        %199 = sbr.rel (%p197) target = $region32
      $region31: #{tpu_custom_call.1} parent=5 // pred_region
        // Predicated region
        $region33: #{tpu_custom_call.1} parent=31 // pred_check
          %p200 = pneg %p51
        $region34: #{tpu_custom_call.1} parent=31 // pred_check_branch
          %202 = sbr.rel (%p200) target = $region36
        $region35: #{tpu_custom_call.1} parent=31 // pred_region
          %s203 = sand.u32 %s41, 1
          %s204 = scalar_lea.sflag [#allocation3], %s203
          %s205 = sand.u32 %s41, 1
          %s206 = smul.addr %s205, 64
          %s207 = scalar_lea.vmem [#allocation2], %s206
          %s208 = smul.u32 2, %s25
          %s210 = ssub.s32 1024, 1024
          %211 = vsyncadd %s204, %s210
          %s212 = smul.addr %s24, 8
          %s213 = sadd.s32 %s208, %s212
          %s214 = smul.addr %s213, 128
          %s215 = scalar_lea.hbm %s0, %s214
          %s216 = sshll.u32 %s207, 4
          %s217 = int_to_ptr.vmem [resolvable:$true] %s216
          %222 = dma.hbm_to_vmem [thread:$0]  %s215, 1024, %s217, %s204, 256, 256, 16
        $region36: #{tpu_custom_call.1} parent=31 // pred_fallthru
          _
      $region32: #{tpu_custom_call.1} parent=5 // pred_fallthru
        _
      %p223 = scmp.le.s32.totalorder 1, %s17
      %p224 = scmp.lt.s32.totalorder %s17, 3
      %p225 = pnand %p223, %p224
      %p226 = pneg %p225
      // Predicated region
      $region37: #{tpu_custom_call.1} parent=5 // pred_check
        _
      $region38: #{tpu_custom_call.1} parent=5 // pred_check_branch
        %228 = sbr.rel (%p225) target = $region40
      $region39: #{tpu_custom_call.1} parent=5 // pred_region
        %s229 = ssub.s32 %s17, 1
        %s230 = sand.u32 %s44, 1
        %s231 = scalar_lea.sflag [#allocation3], %s230
        %s232 = sand.u32 %s44, 1
        %s233 = smul.addr %s232, 64
        %s234 = scalar_lea.vmem [#allocation2], %s233
        // Predicated region
        $region41: #{tpu_custom_call.1} parent=39 // pred_check
          %p235 = pneg %p57
        $region42: #{tpu_custom_call.1} parent=39 // pred_check_branch
          %237 = sbr.rel (%p235) target = $region44
        $region43: #{tpu_custom_call.1} parent=39 // pred_region
          %238 = dma.done %s231, 1024
        $region44: #{tpu_custom_call.1} parent=39 // pred_fallthru
          _
        %s239 = sand.u32 %s44, 1
        %s240 = scalar_lea.sflag [#allocation3], %s239
        %s241 = sand.u32 %s44, 1
        %s242 = smul.addr %s241, 64
        %s243 = scalar_lea.vmem [#allocation2], %s242
        %p244 = pneg %p57
        %p245 = pneg %p54
        %p246 = pneg %p78
        %p247 = pneg %p75
        %p248 = pneg %p99
        %p249 = pneg %p96
        %p250 = pneg %p120
        %p251 = pneg %p117
        %p252 = pneg %p141
        %p253 = pneg %p138
        %p254 = pneg %p169
        %p255 = pneg %p166
        %s256 = sand.u32 %s156, 1
        %s257 = scalar_lea.sflag [#allocation4], %s256
        %s258 = sand.u32 %s156, 1
        %s259 = smul.addr %s258, 32
        %s260 = scalar_lea.vmem [#allocation5], %s259
        %s261 = smul.u32 2, %s27
        %s262 = smul.u32 2, %s27
        %v263 = vld [vmem:[%s234] sm:$0xff]
        %v264 = vld [vmem:[%s234 + $0x8] sm:$0xff]
        %v265 = vld [vmem:[%s234 + $0x10] sm:$0xff]
        %v266 = vld [vmem:[%s234 + $0x18] sm:$0xff]
        %v267 = vld [vmem:[%s234 + $0x20] sm:$0xff]
        %v268 = vld [vmem:[%s234 + $0x28] sm:$0xff]
        %v269 = vld [vmem:[%s234 + $0x30] sm:$0xff]
        %v270 = vld [vmem:[%s234 + $0x38] sm:$0xff]
        %v271 = vld [vmem:[%s1] sm:$0xff]
        %v272 = vld [vmem:[%s1 + $0x8] sm:$0xff]
        %v273 = vld [vmem:[%s1 + $0x10] sm:$0xff]
        %v274 = vld [vmem:[%s1 + $0x18] sm:$0xff]
        %v275 = vld [vmem:[%s2] sm:$0xff]
        %v276 = vld [vmem:[%s2 + $0x8] sm:$0xff]
        %v277 = vld [vmem:[%s2 + $0x10] sm:$0xff]
        %v278 = vld [vmem:[%s2 + $0x18] sm:$0xff]
        %280 = vset.pattern.permute.xlu0 0
        %281 = vperm.xlu0 %280, %v275
        %v282 = vpop.permute.xlu0 %281
        %285 = vset.pattern.permute.xlu0 0
        %286 = vperm.xlu0 %285, %v276
        %v287 = vpop.permute.xlu0 %286
        %290 = vset.pattern.permute.xlu0 0
        %291 = vperm.xlu0 %290, %v277
        %v292 = vpop.permute.xlu0 %291
        %295 = vset.pattern.permute.xlu0 0
        %296 = vperm.xlu0 %295, %v278
        %v297 = vpop.permute.xlu0 %296
        %vm299 = vcmask 261120
        %v301 = vsel %vm299, %v271, 0
        %v304 = vsel %vm299, %v272, 0
        %v307 = vsel %vm299, %v273, 0
        %v310 = vsel %vm299, %v274, 0
        %312 = vmatprep.subr.mxu0 %v264
        %313 = vmatpush1.msra.mxu0 %v263
        %314 = vmatprep.subr.mxu0 %v266
        %315 = vmatpush1.msra.mxu0 %v265
        %316 = vmatprep.subr.mxu0 %v268
        %317 = vmatpush1.msra.mxu0 %v267
        %318 = vmatprep.subr.mxu0 %v270
        %319 = vmatpush1.msra.mxu0 %v269
        %320 = vmatprep.subr.mxu0 0.0
        %321 = vmatpush1.msra.mxu0 0.0
        %322 = vmatprep.subr.mxu0 0.0
        %323 = vmatpush1.msra.mxu0 0.0
        %324 = vmatprep.subr.mxu0 0.0
        %325 = vmatpush1.msra.mxu0 0.0
        %326 = vmatprep.subr.mxu0 0.0
        %327 = vmatpush1.msra.mxu0 0.0
        %328 = vmatprep.subr.mxu0 0.0
        %329 = vmatpush1.msra.mxu0 0.0
        %330 = vmatprep.subr.mxu0 0.0
        %331 = vmatpush1.msra.mxu0 0.0
        %332 = vmatprep.subr.mxu0 0.0
        %333 = vmatpush1.msra.mxu0 0.0
        %334 = vmatprep.subr.mxu0 0.0
        %335 = vmatpush1.msra.mxu0 0.0
        %336 = vmatprep.subr.mxu0 0.0
        %337 = vmatpush1.msra.mxu0 0.0
        %338 = vmatprep.subr.mxu0 0.0
        %339 = vmatpush1.msra.mxu0 0.0
        %340 = vmatprep.subr.mxu0 0.0
        %341 = vmatpush1.msra.mxu0 0.0
        %342 = vmatprep.subr.mxu0 0.0
        %343 = vmatpush1.msra.mxu0 0.0
        %344 = vmatprep.subr.mxu0 0.0
        %345 = vmatpush1.msra.mxu0 0.0
        %346 = vmatprep.subr.mxu0 0.0
        %347 = vmatpush1.msra.mxu0 0.0
        %348 = vmatprep.subr.mxu0 0.0
        %349 = vmatpush1.msra.mxu0 0.0
        %350 = vmatprep.subr.mxu0 0.0
        %351 = vmatpush1.msra.mxu0 0.0
        %352 = vmatprep.subr.mxu0 0.0
        %353 = vmatpush1.msra.mxu0 0.0
        %354 = vmatprep.subr.mxu0 0.0
        %355 = vmatpush1.msra.mxu0 0.0
        %356 = vmatprep.subr.mxu0 0.0
        %357 = vmatpush1.msra.mxu0 0.0
        %358 = vmatprep.subr.mxu0 0.0
        %359 = vmatpush1.msra.mxu0 0.0
        %360 = vmatprep.subr.mxu0 0.0
        %361 = vmatpush1.msra.mxu0 0.0
        %362 = vmatprep.subr.mxu0 0.0
        %363 = vmatpush1.msra.mxu0 0.0
        %364 = vmatprep.subr.mxu0 0.0
        %365 = vmatpush1.msra.mxu0 0.0
        %366 = vmatprep.subr.mxu0 0.0
        %367 = vmatpush1.msra.mxu0 0.0
        %368 = vmatprep.subr.mxu0 0.0
        %369 = vmatpush1.msra.mxu0 0.0
        %370 = vmatprep.subr.mxu0 0.0
        %371 = vmatpush1.msra.mxu0 0.0
        %372 = vmatprep.subr.mxu0 0.0
        %373 = vmatpush1.msra.mxu0 0.0
        %374 = vmatprep.subr.mxu0 0.0
        %375 = vmatpush1.msra.mxu0 0.0
        %376 = vmatprep.mubr.f32.mxu0 0.0
        %377 = vmatmul.mubr.f32.gmra.mrb[0].mxu0 %v301
        %v378 = vpop.f32.mrb[0].mxu0
        %v379 = vadd.f32 %v282, %v378
        %v380 = vpop.f32.mrb[0].mxu0
        %v381 = vadd.f32 %v282, %v380
        %382 = vmatprep.mubr.f32.mxu0 0.0
        %383 = vmatmul.mubr.f32.gmra.mrb[0].mxu0 %v304
        %v384 = vpop.f32.mrb[0].mxu0
        %v385 = vadd.f32 %v287, %v384
        %v386 = vpop.f32.mrb[0].mxu0
        %v387 = vadd.f32 %v287, %v386
        %388 = vmatprep.mubr.f32.mxu0 0.0
        %389 = vmatmul.mubr.f32.gmra.mrb[0].mxu0 %v307
        %v390 = vpop.f32.mrb[0].mxu0
        %v391 = vadd.f32 %v292, %v390
        %v392 = vpop.f32.mrb[0].mxu0
        %v393 = vadd.f32 %v292, %v392
        %394 = vmatprep.mubr.f32.mxu0 0.0
        %395 = vmatmul.mubr.f32.gmra.mrb[0].mxu0 %v310
        %v396 = vpop.f32.mrb[0].mxu0
        %v397 = vadd.f32 %v297, %v396
        %v398 = vpop.f32.mrb[0].mxu0
        %v399 = vadd.f32 %v297, %v398
        %400 = vdwg.mxu0
        %v401 = vmax.f32 %v379, 0.0
        %v402 = vmax.f32 %v381, 0.0
        %v403 = vmax.f32 %v385, 0.0
        %v404 = vmax.f32 %v387, 0.0
        %v405 = vmax.f32 %v391, 0.0
        %v406 = vmax.f32 %v393, 0.0
        %v407 = vmax.f32 %v397, 0.0
        %v408 = vmax.f32 %v399, 0.0
        %v409 = vld [vmem:[%s3] sm:$0xff]
        %v410 = vld [vmem:[%s3 + $0x8] sm:$0xff]
        %v411 = vld [vmem:[%s4] sm:$0xff]
        %v412 = vld [vmem:[%s4 + $0x8] sm:$0xff]
        %414 = vset.pattern.permute.xlu0 0
        %415 = vperm.xlu0 %414, %v411
        %v416 = vpop.permute.xlu0 %415
        %419 = vset.pattern.permute.xlu0 0
        %420 = vperm.xlu0 %419, %v412
        %v421 = vpop.permute.xlu0 %420
        %v424 = vsel %vm299, %v409, 0
        %v427 = vsel %vm299, %v410, 0
        %429 = vmatprep.subr.mxu0 %v402
        %430 = vmatpush1.msra.mxu0 %v401
        %431 = vmatprep.subr.mxu0 %v404
        %432 = vmatpush1.msra.mxu0 %v403
        %433 = vmatprep.subr.mxu0 %v406
        %434 = vmatpush1.msra.mxu0 %v405
        %435 = vmatprep.subr.mxu0 %v408
        %436 = vmatpush1.msra.mxu0 %v407
        %437 = vmatprep.subr.mxu0 0.0
        %438 = vmatpush1.msra.mxu0 0.0
        %439 = vmatprep.subr.mxu0 0.0
        %440 = vmatpush1.msra.mxu0 0.0
        %441 = vmatprep.subr.mxu0 0.0
        %442 = vmatpush1.msra.mxu0 0.0
        %443 = vmatprep.subr.mxu0 0.0
        %444 = vmatpush1.msra.mxu0 0.0
        %445 = vmatprep.subr.mxu0 0.0
        %446 = vmatpush1.msra.mxu0 0.0
        %447 = vmatprep.subr.mxu0 0.0
        %448 = vmatpush1.msra.mxu0 0.0
        %449 = vmatprep.subr.mxu0 0.0
        %450 = vmatpush1.msra.mxu0 0.0
        %451 = vmatprep.subr.mxu0 0.0
        %452 = vmatpush1.msra.mxu0 0.0
        %453 = vmatprep.subr.mxu0 0.0
        %454 = vmatpush1.msra.mxu0 0.0
        %455 = vmatprep.subr.mxu0 0.0
        %456 = vmatpush1.msra.mxu0 0.0
        %457 = vmatprep.subr.mxu0 0.0
        %458 = vmatpush1.msra.mxu0 0.0
        %459 = vmatprep.subr.mxu0 0.0
        %460 = vmatpush1.msra.mxu0 0.0
        %461 = vmatprep.subr.mxu0 0.0
        %462 = vmatpush1.msra.mxu0 0.0
        %463 = vmatprep.subr.mxu0 0.0
        %464 = vmatpush1.msra.mxu0 0.0
        %465 = vmatprep.subr.mxu0 0.0
        %466 = vmatpush1.msra.mxu0 0.0
        %467 = vmatprep.subr.mxu0 0.0
        %468 = vmatpush1.msra.mxu0 0.0
        %469 = vmatprep.subr.mxu0 0.0
        %470 = vmatpush1.msra.mxu0 0.0
        %471 = vmatprep.subr.mxu0 0.0
        %472 = vmatpush1.msra.mxu0 0.0
        %473 = vmatprep.subr.mxu0 0.0
        %474 = vmatpush1.msra.mxu0 0.0
        %475 = vmatprep.subr.mxu0 0.0
        %476 = vmatpush1.msra.mxu0 0.0
        %477 = vmatprep.subr.mxu0 0.0
        %478 = vmatpush1.msra.mxu0 0.0
        %479 = vmatprep.subr.mxu0 0.0
        %480 = vmatpush1.msra.mxu0 0.0
        %481 = vmatprep.subr.mxu0 0.0
        %482 = vmatpush1.msra.mxu0 0.0
        %483 = vmatprep.subr.mxu0 0.0
        %484 = vmatpush1.msra.mxu0 0.0
        %485 = vmatprep.subr.mxu0 0.0
        %486 = vmatpush1.msra.mxu0 0.0
        %487 = vmatprep.subr.mxu0 0.0
        %488 = vmatpush1.msra.mxu0 0.0
        %489 = vmatprep.subr.mxu0 0.0
        %490 = vmatpush1.msra.mxu0 0.0
        %491 = vmatprep.subr.mxu0 0.0
        %492 = vmatpush1.msra.mxu0 0.0
        %493 = vmatprep.mubr.f32.mxu0 0.0
        %494 = vmatmul.mubr.f32.gmra.mrb[0].mxu0 %v424
        %v495 = vpop.f32.mrb[0].mxu0
        %v496 = vadd.f32 %v416, %v495
        %v497 = vpop.f32.mrb[0].mxu0
        %v498 = vadd.f32 %v416, %v497
        %499 = vmatprep.mubr.f32.mxu0 0.0
        %500 = vmatmul.mubr.f32.gmra.mrb[0].mxu0 %v427
        %v501 = vpop.f32.mrb[0].mxu0
        %v502 = vadd.f32 %v421, %v501
        %v503 = vpop.f32.mrb[0].mxu0
        %v504 = vadd.f32 %v421, %v503
        %505 = vdwg.mxu0
        %v506 = vmax.f32 %v496, 0.0
        %v507 = vmax.f32 %v498, 0.0
        %v508 = vmax.f32 %v502, 0.0
        %v509 = vmax.f32 %v504, 0.0
        %510 = vst [vmem:[%s260] sm:$0xff] %v506
        %511 = vst [vmem:[%s260 + $0x8] sm:$0xff] %v507
        %512 = vst [vmem:[%s260 + $0x10] sm:$0xff] %v508
        %513 = vst [vmem:[%s260 + $0x18] sm:$0xff] %v509
        %s514 = sand.u32 %s156, 1
        %s515 = scalar_lea.sflag [#allocation4], %s514
        %s516 = sand.u32 %s156, 1
        %s517 = smul.addr %s516, 32
        %s518 = scalar_lea.vmem [#allocation5], %s517
        // Predicated region
        $region45: #{tpu_custom_call.1} parent=39 // pred_check
          %p519 = pneg %p166
        $region46: #{tpu_custom_call.1} parent=39 // pred_check_branch
          %521 = sbr.rel (%p519) target = $region48
        $region47: #{tpu_custom_call.1} parent=39 // pred_region
          %s522 = smul.u32 2, %s27
          %s524 = ssub.s32 512, 512
          %525 = vsyncadd %s515, %s524
          %s526 = smul.addr %s26, 4
          %s527 = sadd.s32 %s522, %s526
          %s528 = smul.addr %s527, 128
          %s529 = scalar_lea.hbm %s5, %s528
          %s530 = sshll.u32 %s518, 4
          %s531 = int_to_ptr.vmem [resolvable:$true] %s530
          %536 = dma.vmem_to_hbm [thread:$0]  %s531, 512, %s529, %s515, 256, 256, 16
        $region48: #{tpu_custom_call.1} parent=39 // pred_fallthru
          _
      $region40: #{tpu_custom_call.1} parent=5 // pred_fallthru
        _
      %p537 = scmp.le.s32.totalorder 2, %s17
      // Predicated region
      $region49: #{tpu_custom_call.1} parent=5 // pred_check
        %p538 = pneg %p537
      $region50: #{tpu_custom_call.1} parent=5 // pred_check_branch
        %540 = sbr.rel (%p538) target = $region52
      $region51: #{tpu_custom_call.1} parent=5 // pred_region
        %s541 = ssub.s32 %s17, 2
        // Predicated region
        $region53: #{tpu_custom_call.1} parent=51 // pred_check
          %p542 = pneg %p172
        $region54: #{tpu_custom_call.1} parent=51 // pred_check_branch
          %544 = sbr.rel (%p542) target = $region56
        $region55: #{tpu_custom_call.1} parent=51 // pred_region
          %s545 = sand.u32 %s157, 1
          %s546 = scalar_lea.sflag [#allocation4], %s545
          %s547 = sand.u32 %s157, 1
          %s548 = smul.addr %s547, 32
          %s549 = scalar_lea.vmem [#allocation5], %s548
          %550 = dma.done %s546, 512
        $region56: #{tpu_custom_call.1} parent=51 // pred_fallthru
          _
      $region52: #{tpu_custom_call.1} parent=5 // pred_fallthru
        _
    $region6: #{tpu_custom_call.1} parent=1 // loop_footer
      %s21 = sadd.s32 1, %s17
    $region7: #{tpu_custom_call.1} parent=1 // loop_footer_branch
      %16 = sbr.rel target = $region3
    $region8: #{tpu_custom_call.1} parent=1 // loop_exit
      _
    %551 = vsyncpa [#allocation3], 1
    %s552 = scalar_lea.sflag [#allocation3], 1
    %553 = vsyncpa %s552, 1
    %554 = vsyncpa [#allocation4], 1
    %s555 = scalar_lea.sflag [#allocation4], 1
    %556 = vsyncpa %s555, 1

// kernel: tpu_custom_call.1
$region0: #{tpu_custom_call.1}
  #allocation0 [shape = 'u32[]', space=smem, size = 0x4, offset = 0x4, fixed_abs, tag = 'smem constant byte address 0x4 - core index']
  #allocation1 [shape = 'u32[144,128]{1,0:T(1,128)}', space=vmem, size = 0x12000, scoped, tag = 'internal scratch']
  %s0 = inlined_call_operand.hbm [shape: f32[2,32,256], index: 0, kind: input, shape index: {}]
  %s1 = inlined_call_operand.vmem [shape: f32[32,32], index: 1, kind: input, shape index: {}]
  %s2 = inlined_call_operand.vmem [shape: f32[32,1], index: 2, kind: input, shape index: {}]
  %s3 = inlined_call_operand.vmem [shape: f32[16,32], index: 3, kind: input, shape index: {}]
  %s4 = inlined_call_operand.vmem [shape: f32[16,1], index: 4, kind: input, shape index: {}]
  %s5 = inlined_call_operand.hbm [shape: f32[2,16,256], index: 5, kind: output, shape index: {}]
  %s6 = sld [smem:[#allocation0]]
  $region57: #{tpu_custom_call.1} parent=0
    _
  %s8 = ssub.s32 1, %s6
  %s9 = scalar_select 0, %s8, %s6
  $region1: #{tpu_custom_call.1} parent=0
    #allocation2 [shape = 'u8[65536]{0}', space=vmem, size = 0x10000, scoped, tag = 'input window, operand 0']
    #allocation3 [shape = 's32[2]{0}', space=sflag, size = 0x8, scoped, tag = 'scoped memory for tpu_custom_call.1']
    #allocation4 [shape = 's32[2]{0}', space=sflag, size = 0x8, scoped, tag = 'scoped memory for tpu_custom_call.1']
    #allocation5 [shape = 'u8[32768]{0}', space=vmem, size = 0x8000, scoped, tag = 'output window, operand 0']
    %10 = vsyncpa [#allocation3], 0
    %s11 = scalar_lea.sflag [#allocation3], 1
    %12 = vsyncpa %s11, 0
    %13 = vsyncpa [#allocation4], 0
    %s14 = scalar_lea.sflag [#allocation4], 1
    %15 = vsyncpa %s14, 0
    loop: start=0, step=1, limit=4
    $region2: #{tpu_custom_call.1} parent=1 // loop_pre_header
      _
    $region3: #{tpu_custom_call.1} parent=1 // loop_header
      %s17 = sphi 0, %s21
      %p18 = scmp.ge.s32.totalorder %s17, 4
      %s24 = sphi 0, %s36
      %s25 = sphi 0, %s32
      %s26 = sphi 0, %s24
      %s27 = sphi 0, %s25
      %s28 = sphi 0, %s26
      %s29 = sphi 0, %s27
      %s41 = sphi 0, %s43
      %s44 = sphi 0, %s41
      %s45 = sphi 0, %s44
      %s61 = sphi 0, %s45
      %s65 = sphi 0, %s65
      %s67 = sphi 0, %s65
      %s68 = sphi 0, %s67
      %s82 = sphi 0, %s68
      %s86 = sphi 0, %s86
      %s88 = sphi 0, %s86
      %s89 = sphi 0, %s88
      %s103 = sphi 0, %s89
      %s107 = sphi 0, %s107
      %s109 = sphi 0, %s107
      %s110 = sphi 0, %s109
      %s124 = sphi 0, %s110
      %s128 = sphi 0, %s128
      %s130 = sphi 0, %s128
      %s131 = sphi 0, %s130
      %s145 = sphi 0, %s131
      %s153 = sphi 0, %s155
      %s156 = sphi 0, %s153
      %s157 = sphi 0, %s156
      %s173 = sphi 0, %s157
    $region4: #{tpu_custom_call.1} parent=1 // loop_header_branch
      %20 = sbr.rel (%p18) target = $region8
    $region5: #{tpu_custom_call.1} parent=1 // loop_body
      %s22 = ssub.s32 %s17, 1
      %s23 = ssub.s32 %s17, 2
      %s30 = sadd.s32 1, %s25
      %p31 = scmp.ge.s32.totalorder %s30, 1
      %s32 = scalar_select %p31, 0, %s30
      %s33 = sadd.s32 1, %s24
      %s34 = scalar_select %p31, %s33, %s24
      %p35 = scmp.ge.s32.totalorder %s34, 2
      %s36 = scalar_select %p35, 0, %s34
      %s37 = ssub.s32 %s24, %s36
      %s38 = ssub.s32 %s25, %s32
      %s39 = sor.u32 %s37, %s38
      %p40 = scmp.eq.s32.totalorder %s39, 0
      %s42 = sadd.s32 %s41, 1
      %s43 = scalar_select %p40, %s41, %s42
      %p46 = pneg %p40
      %p47 = scmp.eq.s32.totalorder %s17, 1
      %p48 = por %p46, %p47
      %p49 = scmp.ne.s32.totalorder %s41, %s44
      %p50 = scmp.eq.s32.totalorder %s17, 0
      %p51 = por %p49, %p50
      %p52 = scmp.ne.s32.totalorder %s41, %s44
      %p53 = scmp.eq.s32.totalorder %s22, 1
      %p54 = por %p52, %p53
      %p55 = scmp.ne.s32.totalorder %s44, %s45
      %p56 = scmp.eq.s32.totalorder %s22, 0
      %p57 = por %p55, %p56
      %p58 = scmp.ne.s32.totalorder %s44, %s45
      %p59 = scmp.eq.s32.totalorder %s23, 1
      %p60 = por %p58, %p59
      %p62 = scmp.ne.s32.totalorder %s45, %s61
      %p63 = scmp.eq.s32.totalorder %s23, 0
      %p64 = por %p62, %p63
      %s66 = sadd.s32 %s65, 1
      %p69 = scmp.eq.s32.totalorder %s17, 1
      %p70 = scmp.ne.s32.totalorder %s65, %s67
      %p71 = scmp.eq.s32.totalorder %s17, 0
      %p72 = por %p70, %p71
      %p73 = scmp.ne.s32.totalorder %s65, %s67
      %p74 = scmp.eq.s32.totalorder %s22, 1
      %p75 = por %p73, %p74
      %p76 = scmp.ne.s32.totalorder %s67, %s68
      %p77 = scmp.eq.s32.totalorder %s22, 0
      %p78 = por %p76, %p77
      %p79 = scmp.ne.s32.totalorder %s67, %s68
      %p80 = scmp.eq.s32.totalorder %s23, 1
      %p81 = por %p79, %p80
      %p83 = scmp.ne.s32.totalorder %s68, %s82
      %p84 = scmp.eq.s32.totalorder %s23, 0
      %p85 = por %p83, %p84
      %s87 = sadd.s32 %s86, 1
      %p90 = scmp.eq.s32.totalorder %s17, 1
      %p91 = scmp.ne.s32.totalorder %s86, %s88
      %p92 = scmp.eq.s32.totalorder %s17, 0
      %p93 = por %p91, %p92
      %p94 = scmp.ne.s32.totalorder %s86, %s88
      %p95 = scmp.eq.s32.totalorder %s22, 1
      %p96 = por %p94, %p95
      %p97 = scmp.ne.s32.totalorder %s88, %s89
      %p98 = scmp.eq.s32.totalorder %s22, 0
      %p99 = por %p97, %p98
      %p100 = scmp.ne.s32.totalorder %s88, %s89
      %p101 = scmp.eq.s32.totalorder %s23, 1
      %p102 = por %p100, %p101
      %p104 = scmp.ne.s32.totalorder %s89, %s103
      %p105 = scmp.eq.s32.totalorder %s23, 0
      %p106 = por %p104, %p105
      %s108 = sadd.s32 %s107, 1
      %p111 = scmp.eq.s32.totalorder %s17, 1
      %p112 = scmp.ne.s32.totalorder %s107, %s109
      %p113 = scmp.eq.s32.totalorder %s17, 0
      %p114 = por %p112, %p113
      %p115 = scmp.ne.s32.totalorder %s107, %s109
      %p116 = scmp.eq.s32.totalorder %s22, 1
      %p117 = por %p115, %p116
      %p118 = scmp.ne.s32.totalorder %s109, %s110
      %p119 = scmp.eq.s32.totalorder %s22, 0
      %p120 = por %p118, %p119
      %p121 = scmp.ne.s32.totalorder %s109, %s110
      %p122 = scmp.eq.s32.totalorder %s23, 1
      %p123 = por %p121, %p122
      %p125 = scmp.ne.s32.totalorder %s110, %s124
      %p126 = scmp.eq.s32.totalorder %s23, 0
      %p127 = por %p125, %p126
      %s129 = sadd.s32 %s128, 1
      %p132 = scmp.eq.s32.totalorder %s17, 1
      %p133 = scmp.ne.s32.totalorder %s128, %s130
      %p134 = scmp.eq.s32.totalorder %s17, 0
      %p135 = por %p133, %p134
      %p136 = scmp.ne.s32.totalorder %s128, %s130
      %p137 = scmp.eq.s32.totalorder %s22, 1
      %p138 = por %p136, %p137
      %p139 = scmp.ne.s32.totalorder %s130, %s131
      %p140 = scmp.eq.s32.totalorder %s22, 0
      %p141 = por %p139, %p140
      %p142 = scmp.ne.s32.totalorder %s130, %s131
      %p143 = scmp.eq.s32.totalorder %s23, 1
      %p144 = por %p142, %p143
      %p146 = scmp.ne.s32.totalorder %s131, %s145
      %p147 = scmp.eq.s32.totalorder %s23, 0
      %p148 = por %p146, %p147
      %s149 = ssub.s32 %s24, %s36
      %s150 = ssub.s32 %s25, %s32
      %s151 = sor.u32 %s149, %s150
      %p152 = scmp.eq.s32.totalorder %s151, 0
      %s154 = sadd.s32 %s153, 1
      %s155 = scalar_select %p152, %s153, %s154
      %p158 = pneg %p152
      %p159 = scmp.eq.s32.totalorder %s17, 1
      %p160 = por %p158, %p159
      %p161 = scmp.ne.s32.totalorder %s153, %s156
      %p162 = scmp.eq.s32.totalorder %s17, 0
      %p163 = por %p161, %p162
      %p164 = scmp.ne.s32.totalorder %s153, %s156
      %p165 = scmp.eq.s32.totalorder %s22, 1
      %p166 = por %p164, %p165
      %p167 = scmp.ne.s32.totalorder %s156, %s157
      %p168 = scmp.eq.s32.totalorder %s22, 0
      %p169 = por %p167, %p168
      %p170 = scmp.ne.s32.totalorder %s156, %s157
      %p171 = scmp.eq.s32.totalorder %s23, 1
      %p172 = por %p170, %p171
      %p174 = scmp.ne.s32.totalorder %s157, %s173
      %p175 = scmp.eq.s32.totalorder %s23, 0
      %p176 = por %p174, %p175
      %p177 = scmp.le.s32.totalorder 1, %s17
      %p178 = scmp.lt.s32.totalorder %s17, 3
      %p179 = pnand %p177, %p178
      %p180 = pneg %p179
      // Predicated region
      $region9: #{tpu_custom_call.1} parent=5 // pred_check
        _
      $region10: #{tpu_custom_call.1} parent=5 // pred_check_branch
        %182 = sbr.rel (%p179) target = $region12
      $region11: #{tpu_custom_call.1} parent=5 // pred_region
        %s183 = ssub.s32 %s17, 1
        // Predicated region
        $region13: #{tpu_custom_call.1} parent=11 // pred_check
          %p184 = pneg %p78
        $region14: #{tpu_custom_call.1} parent=11 // pred_check_branch
          %186 = sbr.rel (%p184) target = $region16
        $region15: #{tpu_custom_call.1} parent=11 // pred_region
          _
        $region16: #{tpu_custom_call.1} parent=11 // pred_fallthru
          _
        // Predicated region
        $region17: #{tpu_custom_call.1} parent=11 // pred_check
          %p187 = pneg %p99
        $region18: #{tpu_custom_call.1} parent=11 // pred_check_branch
          %189 = sbr.rel (%p187) target = $region20
        $region19: #{tpu_custom_call.1} parent=11 // pred_region
          _
        $region20: #{tpu_custom_call.1} parent=11 // pred_fallthru
          _
        // Predicated region
        $region21: #{tpu_custom_call.1} parent=11 // pred_check
          %p190 = pneg %p120
        $region22: #{tpu_custom_call.1} parent=11 // pred_check_branch
          %192 = sbr.rel (%p190) target = $region24
        $region23: #{tpu_custom_call.1} parent=11 // pred_region
          _
        $region24: #{tpu_custom_call.1} parent=11 // pred_fallthru
          _
        // Predicated region
        $region25: #{tpu_custom_call.1} parent=11 // pred_check
          %p193 = pneg %p141
        $region26: #{tpu_custom_call.1} parent=11 // pred_check_branch
          %195 = sbr.rel (%p193) target = $region28
        $region27: #{tpu_custom_call.1} parent=11 // pred_region
          _
        $region28: #{tpu_custom_call.1} parent=11 // pred_fallthru
          _
      $region12: #{tpu_custom_call.1} parent=5 // pred_fallthru
        _
      %p196 = scmp.lt.s32.totalorder %s17, 2
      // Predicated region
      $region29: #{tpu_custom_call.1} parent=5 // pred_check
        %p197 = pneg %p196
      $region30: #{tpu_custom_call.1} parent=5 // pred_check_branch
        %199 = sbr.rel (%p197) target = $region32
      $region31: #{tpu_custom_call.1} parent=5 // pred_region
        // Predicated region
        $region33: #{tpu_custom_call.1} parent=31 // pred_check
          %p200 = pneg %p51
        $region34: #{tpu_custom_call.1} parent=31 // pred_check_branch
          %202 = sbr.rel (%p200) target = $region36
        $region35: #{tpu_custom_call.1} parent=31 // pred_region
          %s203 = sand.u32 %s41, 1
          %s204 = scalar_lea.sflag [#allocation3], %s203
          %s205 = sand.u32 %s41, 1
          %s206 = smul.addr %s205, 64
          %s207 = scalar_lea.vmem [#allocation2], %s206
          %s208 = smul.u32 2, %s25
          %s210 = ssub.s32 1024, 1024
          %211 = vsyncadd %s204, %s210
          %s212 = smul.addr %s24, 8
          %s213 = sadd.s32 %s208, %s212
          %s214 = smul.addr %s213, 128
          %s215 = scalar_lea.hbm %s0, %s214
          %s216 = sshll.u32 %s207, 4
          %s217 = int_to_ptr.vmem [resolvable:$true] %s216
          %222 = dma.hbm_to_vmem [thread:$0]  %s215, 1024, %s217, %s204, 256, 256, 16
        $region36: #{tpu_custom_call.1} parent=31 // pred_fallthru
          _
      $region32: #{tpu_custom_call.1} parent=5 // pred_fallthru
        _
      %p223 = scmp.le.s32.totalorder 1, %s17
      %p224 = scmp.lt.s32.totalorder %s17, 3
      %p225 = pnand %p223, %p224
      %p226 = pneg %p225
      // Predicated region
      $region37: #{tpu_custom_call.1} parent=5 // pred_check
        _
      $region38: #{tpu_custom_call.1} parent=5 // pred_check_branch
        %228 = sbr.rel (%p225) target = $region40
      $region39: #{tpu_custom_call.1} parent=5 // pred_region
        %s229 = ssub.s32 %s17, 1
        %s230 = sand.u32 %s44, 1
        %s231 = scalar_lea.sflag [#allocation3], %s230
        %s232 = sand.u32 %s44, 1
        %s233 = smul.addr %s232, 64
        %s234 = scalar_lea.vmem [#allocation2], %s233
        // Predicated region
        $region41: #{tpu_custom_call.1} parent=39 // pred_check
          %p235 = pneg %p57
        $region42: #{tpu_custom_call.1} parent=39 // pred_check_branch
          %237 = sbr.rel (%p235) target = $region44
        $region43: #{tpu_custom_call.1} parent=39 // pred_region
          %238 = dma.done %s231, 1024
        $region44: #{tpu_custom_call.1} parent=39 // pred_fallthru
          _
        %s239 = sand.u32 %s44, 1
        %s240 = scalar_lea.sflag [#allocation3], %s239
        %s241 = sand.u32 %s44, 1
        %s242 = smul.addr %s241, 64
        %s243 = scalar_lea.vmem [#allocation2], %s242
        %p244 = pneg %p57
        %p245 = pneg %p54
        %p246 = pneg %p78
        %p247 = pneg %p75
        %p248 = pneg %p99
        %p249 = pneg %p96
        %p250 = pneg %p120
        %p251 = pneg %p117
        %p252 = pneg %p141
        %p253 = pneg %p138
        %p254 = pneg %p169
        %p255 = pneg %p166
        %s256 = sand.u32 %s156, 1
        %s257 = scalar_lea.sflag [#allocation4], %s256
        %s258 = sand.u32 %s156, 1
        %s259 = smul.addr %s258, 32
        %s260 = scalar_lea.vmem [#allocation5], %s259
        %s261 = smul.u32 2, %s27
        %s262 = smul.u32 2, %s27
        %v263 = vld [vmem:[%s234] sm:$0xff]
        %v264 = vld [vmem:[%s234 + $0x8] sm:$0xff]
        %v265 = vld [vmem:[%s234 + $0x10] sm:$0xff]
        %v266 = vld [vmem:[%s234 + $0x18] sm:$0xff]
        %v267 = vld [vmem:[%s234 + $0x20] sm:$0xff]
        %v268 = vld [vmem:[%s234 + $0x28] sm:$0xff]
        %v269 = vld [vmem:[%s234 + $0x30] sm:$0xff]
        %v270 = vld [vmem:[%s234 + $0x38] sm:$0xff]
        %v271 = vld [vmem:[%s1] sm:$0xff]
        %v272 = vld [vmem:[%s1 + $0x8] sm:$0xff]
        %v273 = vld [vmem:[%s1 + $0x10] sm:$0xff]
        %v274 = vld [vmem:[%s1 + $0x18] sm:$0xff]
        %v275 = vld [vmem:[%s2] sm:$0xff]
        %v276 = vld [vmem:[%s2 + $0x8] sm:$0xff]
        %v277 = vld [vmem:[%s2 + $0x10] sm:$0xff]
        %v278 = vld [vmem:[%s2 + $0x18] sm:$0xff]
        %280 = vset.pattern.permute.xlu0 0
        %281 = vperm.xlu0 %280, %v275
        %v282 = vpop.permute.xlu0 %281
        %285 = vset.pattern.permute.xlu0 0
        %286 = vperm.xlu0 %285, %v276
        %v287 = vpop.permute.xlu0 %286
        %290 = vset.pattern.permute.xlu0 0
        %291 = vperm.xlu0 %290, %v277
        %v292 = vpop.permute.xlu0 %291
        %295 = vset.pattern.permute.xlu0 0
        %296 = vperm.xlu0 %295, %v278
        %v297 = vpop.permute.xlu0 %296
        %vm299 = vcmask 261120
        %v301 = vsel %vm299, %v271, 0
        %v304 = vsel %vm299, %v272, 0
        %v307 = vsel %vm299, %v273, 0
        %v310 = vsel %vm299, %v274, 0
        %312 = vmatprep.subr.mxu0 %v264
        %313 = vmatpush1.msra.mxu0 %v263
        %314 = vmatprep.subr.mxu0 %v266
        %315 = vmatpush1.msra.mxu0 %v265
        %316 = vmatprep.subr.mxu0 %v268
        %317 = vmatpush1.msra.mxu0 %v267
        %318 = vmatprep.subr.mxu0 %v270
        %319 = vmatpush1.msra.mxu0 %v269
        %320 = vmatprep.subr.mxu0 0.0
        %321 = vmatpush1.msra.mxu0 0.0
        %322 = vmatprep.subr.mxu0 0.0
        %323 = vmatpush1.msra.mxu0 0.0
        %324 = vmatprep.subr.mxu0 0.0
        %325 = vmatpush1.msra.mxu0 0.0
        %326 = vmatprep.subr.mxu0 0.0
        %327 = vmatpush1.msra.mxu0 0.0
        %328 = vmatprep.subr.mxu0 0.0
        %329 = vmatpush1.msra.mxu0 0.0
        %330 = vmatprep.subr.mxu0 0.0
        %331 = vmatpush1.msra.mxu0 0.0
        %332 = vmatprep.subr.mxu0 0.0
        %333 = vmatpush1.msra.mxu0 0.0
        %334 = vmatprep.subr.mxu0 0.0
        %335 = vmatpush1.msra.mxu0 0.0
        %336 = vmatprep.subr.mxu0 0.0
        %337 = vmatpush1.msra.mxu0 0.0
        %338 = vmatprep.subr.mxu0 0.0
        %339 = vmatpush1.msra.mxu0 0.0
        %340 = vmatprep.subr.mxu0 0.0
        %341 = vmatpush1.msra.mxu0 0.0
        %342 = vmatprep.subr.mxu0 0.0
        %343 = vmatpush1.msra.mxu0 0.0
        %344 = vmatprep.subr.mxu0 0.0
        %345 = vmatpush1.msra.mxu0 0.0
        %346 = vmatprep.subr.mxu0 0.0
        %347 = vmatpush1.msra.mxu0 0.0
        %348 = vmatprep.subr.mxu0 0.0
        %349 = vmatpush1.msra.mxu0 0.0
        %350 = vmatprep.subr.mxu0 0.0
        %351 = vmatpush1.msra.mxu0 0.0
        %352 = vmatprep.subr.mxu0 0.0
        %353 = vmatpush1.msra.mxu0 0.0
        %354 = vmatprep.subr.mxu0 0.0
        %355 = vmatpush1.msra.mxu0 0.0
        %356 = vmatprep.subr.mxu0 0.0
        %357 = vmatpush1.msra.mxu0 0.0
        %358 = vmatprep.subr.mxu0 0.0
        %359 = vmatpush1.msra.mxu0 0.0
        %360 = vmatprep.subr.mxu0 0.0
        %361 = vmatpush1.msra.mxu0 0.0
        %362 = vmatprep.subr.mxu0 0.0
        %363 = vmatpush1.msra.mxu0 0.0
        %364 = vmatprep.subr.mxu0 0.0
        %365 = vmatpush1.msra.mxu0 0.0
        %366 = vmatprep.subr.mxu0 0.0
        %367 = vmatpush1.msra.mxu0 0.0
        %368 = vmatprep.subr.mxu0 0.0
        %369 = vmatpush1.msra.mxu0 0.0
        %370 = vmatprep.subr.mxu0 0.0
        %371 = vmatpush1.msra.mxu0 0.0
        %372 = vmatprep.subr.mxu0 0.0
        %373 = vmatpush1.msra.mxu0 0.0
        %374 = vmatprep.subr.mxu0 0.0
        %375 = vmatpush1.msra.mxu0 0.0
        %376 = vmatprep.mubr.f32.mxu0 0.0
        %377 = vmatmul.mubr.f32.gmra.mrb[0].mxu0 %v301
        %v378 = vpop.f32.mrb[0].mxu0
        %v379 = vadd.f32 %v282, %v378
        %v380 = vpop.f32.mrb[0].mxu0
        %v381 = vadd.f32 %v282, %v380
        %382 = vmatprep.mubr.f32.mxu0 0.0
        %383 = vmatmul.mubr.f32.gmra.mrb[0].mxu0 %v304
        %v384 = vpop.f32.mrb[0].mxu0
        %v385 = vadd.f32 %v287, %v384
        %v386 = vpop.f32.mrb[0].mxu0
        %v387 = vadd.f32 %v287, %v386
        %388 = vmatprep.mubr.f32.mxu0 0.0
        %389 = vmatmul.mubr.f32.gmra.mrb[0].mxu0 %v307
        %v390 = vpop.f32.mrb[0].mxu0
        %v391 = vadd.f32 %v292, %v390
        %v392 = vpop.f32.mrb[0].mxu0
        %v393 = vadd.f32 %v292, %v392
        %394 = vmatprep.mubr.f32.mxu0 0.0
        %395 = vmatmul.mubr.f32.gmra.mrb[0].mxu0 %v310
        %v396 = vpop.f32.mrb[0].mxu0
        %v397 = vadd.f32 %v297, %v396
        %v398 = vpop.f32.mrb[0].mxu0
        %v399 = vadd.f32 %v297, %v398
        %400 = vdwg.mxu0
        %v401 = vmax.f32 %v379, 0.0
        %v402 = vmax.f32 %v381, 0.0
        %v403 = vmax.f32 %v385, 0.0
        %v404 = vmax.f32 %v387, 0.0
        %v405 = vmax.f32 %v391, 0.0
        %v406 = vmax.f32 %v393, 0.0
        %v407 = vmax.f32 %v397, 0.0
        %v408 = vmax.f32 %v399, 0.0
        %v409 = vld [vmem:[%s3] sm:$0xff]
        %v410 = vld [vmem:[%s3 + $0x8] sm:$0xff]
        %v411 = vld [vmem:[%s4] sm:$0xff]
        %v412 = vld [vmem:[%s4 + $0x8] sm:$0xff]
        %414 = vset.pattern.permute.xlu0 0
        %415 = vperm.xlu0 %414, %v411
        %v416 = vpop.permute.xlu0 %415
        %419 = vset.pattern.permute.xlu0 0
        %420 = vperm.xlu0 %419, %v412
        %v421 = vpop.permute.xlu0 %420
        %v424 = vsel %vm299, %v409, 0
        %v427 = vsel %vm299, %v410, 0
        %429 = vmatprep.subr.mxu0 %v402
        %430 = vmatpush1.msra.mxu0 %v401
        %431 = vmatprep.subr.mxu0 %v404
        %432 = vmatpush1.msra.mxu0 %v403
        %433 = vmatprep.subr.mxu0 %v406
        %434 = vmatpush1.msra.mxu0 %v405
        %435 = vmatprep.subr.mxu0 %v408
        %436 = vmatpush1.msra.mxu0 %v407
        %437 = vmatprep.subr.mxu0 0.0
        %438 = vmatpush1.msra.mxu0 0.0
        %439 = vmatprep.subr.mxu0 0.0
        %440 = vmatpush1.msra.mxu0 0.0
        %441 = vmatprep.subr.mxu0 0.0
        %442 = vmatpush1.msra.mxu0 0.0
        %443 = vmatprep.subr.mxu0 0.0
        %444 = vmatpush1.msra.mxu0 0.0
        %445 = vmatprep.subr.mxu0 0.0
        %446 = vmatpush1.msra.mxu0 0.0
        %447 = vmatprep.subr.mxu0 0.0
        %448 = vmatpush1.msra.mxu0 0.0
        %449 = vmatprep.subr.mxu0 0.0
        %450 = vmatpush1.msra.mxu0 0.0
        %451 = vmatprep.subr.mxu0 0.0
        %452 = vmatpush1.msra.mxu0 0.0
        %453 = vmatprep.subr.mxu0 0.0
        %454 = vmatpush1.msra.mxu0 0.0
        %455 = vmatprep.subr.mxu0 0.0
        %456 = vmatpush1.msra.mxu0 0.0
        %457 = vmatprep.subr.mxu0 0.0
        %458 = vmatpush1.msra.mxu0 0.0
        %459 = vmatprep.subr.mxu0 0.0
        %460 = vmatpush1.msra.mxu0 0.0
        %461 = vmatprep.subr.mxu0 0.0
        %462 = vmatpush1.msra.mxu0 0.0
        %463 = vmatprep.subr.mxu0 0.0
        %464 = vmatpush1.msra.mxu0 0.0
        %465 = vmatprep.subr.mxu0 0.0
        %466 = vmatpush1.msra.mxu0 0.0
        %467 = vmatprep.subr.mxu0 0.0
        %468 = vmatpush1.msra.mxu0 0.0
        %469 = vmatprep.subr.mxu0 0.0
        %470 = vmatpush1.msra.mxu0 0.0
        %471 = vmatprep.subr.mxu0 0.0
        %472 = vmatpush1.msra.mxu0 0.0
        %473 = vmatprep.subr.mxu0 0.0
        %474 = vmatpush1.msra.mxu0 0.0
        %475 = vmatprep.subr.mxu0 0.0
        %476 = vmatpush1.msra.mxu0 0.0
        %477 = vmatprep.subr.mxu0 0.0
        %478 = vmatpush1.msra.mxu0 0.0
        %479 = vmatprep.subr.mxu0 0.0
        %480 = vmatpush1.msra.mxu0 0.0
        %481 = vmatprep.subr.mxu0 0.0
        %482 = vmatpush1.msra.mxu0 0.0
        %483 = vmatprep.subr.mxu0 0.0
        %484 = vmatpush1.msra.mxu0 0.0
        %485 = vmatprep.subr.mxu0 0.0
        %486 = vmatpush1.msra.mxu0 0.0
        %487 = vmatprep.subr.mxu0 0.0
        %488 = vmatpush1.msra.mxu0 0.0
        %489 = vmatprep.subr.mxu0 0.0
        %490 = vmatpush1.msra.mxu0 0.0
        %491 = vmatprep.subr.mxu0 0.0
        %492 = vmatpush1.msra.mxu0 0.0
        %493 = vmatprep.mubr.f32.mxu0 0.0
        %494 = vmatmul.mubr.f32.gmra.mrb[0].mxu0 %v424
        %v495 = vpop.f32.mrb[0].mxu0
        %v496 = vadd.f32 %v416, %v495
        %v497 = vpop.f32.mrb[0].mxu0
        %v498 = vadd.f32 %v416, %v497
        %499 = vmatprep.mubr.f32.mxu0 0.0
        %500 = vmatmul.mubr.f32.gmra.mrb[0].mxu0 %v427
        %v501 = vpop.f32.mrb[0].mxu0
        %v502 = vadd.f32 %v421, %v501
        %v503 = vpop.f32.mrb[0].mxu0
        %v504 = vadd.f32 %v421, %v503
        %505 = vdwg.mxu0
        %v506 = vmax.f32 %v496, 0.0
        %v507 = vmax.f32 %v498, 0.0
        %v508 = vmax.f32 %v502, 0.0
        %v509 = vmax.f32 %v504, 0.0
        %510 = vst [vmem:[%s260] sm:$0xff] %v506
        %511 = vst [vmem:[%s260 + $0x8] sm:$0xff] %v507
        %512 = vst [vmem:[%s260 + $0x10] sm:$0xff] %v508
        %513 = vst [vmem:[%s260 + $0x18] sm:$0xff] %v509
        %s514 = sand.u32 %s156, 1
        %s515 = scalar_lea.sflag [#allocation4], %s514
        %s516 = sand.u32 %s156, 1
        %s517 = smul.addr %s516, 32
        %s518 = scalar_lea.vmem [#allocation5], %s517
        // Predicated region
        $region45: #{tpu_custom_call.1} parent=39 // pred_check
          %p519 = pneg %p166
        $region46: #{tpu_custom_call.1} parent=39 // pred_check_branch
          %521 = sbr.rel (%p519) target = $region48
        $region47: #{tpu_custom_call.1} parent=39 // pred_region
          %s522 = smul.u32 2, %s27
          %s524 = ssub.s32 512, 512
          %525 = vsyncadd %s515, %s524
          %s526 = smul.addr %s26, 4
          %s527 = sadd.s32 %s522, %s526
          %s528 = smul.addr %s527, 128
          %s529 = scalar_lea.hbm %s5, %s528
          %s530 = sshll.u32 %s518, 4
          %s531 = int_to_ptr.vmem [resolvable:$true] %s530
          %536 = dma.vmem_to_hbm [thread:$0]  %s531, 512, %s529, %s515, 256, 256, 16
        $region48: #{tpu_custom_call.1} parent=39 // pred_fallthru
          _
      $region40: #{tpu_custom_call.1} parent=5 // pred_fallthru
        _
      %p537 = scmp.le.s32.totalorder 2, %s17
      // Predicated region
      $region49: #{tpu_custom_call.1} parent=5 // pred_check
        %p538 = pneg %p537
      $region50: #{tpu_custom_call.1} parent=5 // pred_check_branch
        %540 = sbr.rel (%p538) target = $region52
      $region51: #{tpu_custom_call.1} parent=5 // pred_region
        %s541 = ssub.s32 %s17, 2
        // Predicated region
        $region53: #{tpu_custom_call.1} parent=51 // pred_check
          %p542 = pneg %p172
        $region54: #{tpu_custom_call.1} parent=51 // pred_check_branch
          %544 = sbr.rel (%p542) target = $region56
        $region55: #{tpu_custom_call.1} parent=51 // pred_region
          %s545 = sand.u32 %s157, 1
          %s546 = scalar_lea.sflag [#allocation4], %s545
          %s547 = sand.u32 %s157, 1
          %s548 = smul.addr %s547, 32
          %s549 = scalar_lea.vmem [#allocation5], %s548
          %550 = dma.done %s546, 512
        $region56: #{tpu_custom_call.1} parent=51 // pred_fallthru
          _
      $region52: #{tpu_custom_call.1} parent=5 // pred_fallthru
        _
    $region6: #{tpu_custom_call.1} parent=1 // loop_footer
      %s21 = sadd.s32 1, %s17
    $region7: #{tpu_custom_call.1} parent=1 // loop_footer_branch
      %16 = sbr.rel target = $region3
    $region8: #{tpu_custom_call.1} parent=1 // loop_exit
      _
    %551 = vsyncpa [#allocation3], 1
    %s552 = scalar_lea.sflag [#allocation3], 1
    %553 = vsyncpa %s552, 1
    %554 = vsyncpa [#allocation4], 1
    %s555 = scalar_lea.sflag [#allocation4], 1
    %556 = vsyncpa %s555, 1

</llo_original>
